<compile_context>
chip_gen: v5e
topology: v5e:2x2
jax: 0.10.0
libtpu: 0.0.40
codegen_flags: <defaults>
</compile_context>

<pallas_src>
import functools
import math

import jax
import jax.numpy as jnp
import numpy as np
from jax.experimental import pallas as pl
from jax.experimental.pallas import tpu as pltpu


def _cdiv(a, b):
    return -(-a // b)


@functools.lru_cache(maxsize=1)
def _tpu_generation():
    """Best-effort TPU generation (5 / 6 / 7); defaults to 6 if unknown."""
    try:
        kind = jax.devices()[0].device_kind.lower()
    except Exception:  # non-TPU backend / query failure
        return 6
    if "v5" in kind:
        return 5
    if "v6" in kind:
        return 6
    if "v7" in kind or "7x" in kind:
        return 7
    return 6


def _pool_matmul_kernel(x_ref, a_ref, o_ref, *, compute_dtype):
    # x_ref: (TM, G*2W)     packed row-pairs (contiguous load)
    # a_ref: (G*2W, G*Wout) block-diagonal pooling matrix (0.5 / 0.25 entries)
    # o_ref: (TM, G*Wout)   lane-dense output (multiple of 128 lanes when possible)
    x = x_ref[...]
    a = a_ref[...]
    if compute_dtype is not None:
        # Optional low-precision MXU path (e.g. bf16 on v5e); 0.5/0.25 weights
        # are exact in bf16, accumulation stays f32.
        x = x.astype(compute_dtype)
        a = a.astype(compute_dtype)
    o_ref[...] = jnp.dot(x, a, preferred_element_type=jnp.float32).astype(o_ref.dtype)


def _pick_group(n_pairs, k_in, k_out, *, max_in_lanes=1024, lane=128):
    """Pick G (row-pairs packed per flat row) and the (possibly padded) n_pairs.

    Preference order (all subject to G*k_in <= max_in_lanes):
      1. divisor of n_pairs with (G*k_out) % 128 == 0   -> unmasked stores, no copy
      2. smallest G with (G*k_out) % 128 == 0, padding n_pairs up to a multiple
      3. divisor of n_pairs with G*k_out >= 128
      4. largest fitting divisor
    Returns (G, n_pairs_padded).
    """
    max_g = max(1, max_in_lanes // k_in)
    divisors = [g for g in range(1, min(max_g, n_pairs) + 1) if n_pairs % g == 0]
    for g in divisors:                                  # 1) smallest lane-dense divisor
        if (g * k_out) % lane == 0:
            return g, n_pairs
    g_dense = lane // math.gcd(k_out, lane)             # 2) pad to lane-dense G
    if g_dense <= max_g:
        return g_dense, g_dense * _cdiv(n_pairs, g_dense)
    for g in divisors:                                  # 3) at least 128 output lanes
        if g * k_out >= lane:
            return g, n_pairs
    return (divisors[-1] if divisors else 1), n_pairs   # 4) best effort


@functools.lru_cache(maxsize=None)
def _pooling_matrix_np(layer_type, W, G, dtype_name):
    """Block-diagonal pooling matrix, built once per (layer_type, W, G, dtype)."""
    if layer_type == 'timepreserve':
        eye = np.eye(W, dtype=np.float64)
        blk = np.concatenate([eye, eye], axis=0) * 0.5            # (2W, W)
    else:  # 'half'
        Wo = W // 2
        e = np.repeat(np.eye(Wo, dtype=np.float64), 2, axis=0)    # (W, Wo)
        blk = np.concatenate([e, e], axis=0) * 0.25               # (2W, Wo)
    return np.kron(np.eye(G, dtype=np.float64), blk).astype(np.dtype(dtype_name))


def downsample(x, layer_type, *, compute_dtype=None):
    """Pallas implementation of DownSample.forward for NCHW input x.

    compute_dtype: optional in-kernel matmul dtype (e.g. jnp.bfloat16 on v5e to
    avoid the slow f32 MXU path); off by default to keep f32-exact semantics.
    """
    if layer_type == 'none':
        return x
    if layer_type not in ('timepreserve', 'half'):
        raise RuntimeError(
            'Got unexpected donwsampletype %s, expected is [none, timepreserve, half]'
            % layer_type)

    N, C, H, W = x.shape
    # avg_pool2d with kernel == stride floors odd spatial dims: trim up front.
    # NOTE: trimming makes x non-contiguous, so the later reshape materialises a
    # full HBM copy; the fast path assumes even H (and even W for 'half').
    # TODO(synk): handle odd H/W inside the kernel (index_map skipping the last
    # row/col) to avoid that extra HBM pass.
    if H % 2:
        x = x[:, :, : H - 1, :]
        H -= 1
    if layer_type == 'half' and W % 2:
        x = x[:, :, :, : W - 1]
        W -= 1

    Ho = H // 2
    Wo = W if layer_type == 'timepreserve' else W // 2
    n_pairs = N * C * Ho

    if n_pairs == 0 or Wo == 0:               # degenerate shapes -> empty output
        return jnp.zeros((N, C, Ho, Wo), dtype=x.dtype)

    k_in, k_out = 2 * W, Wo
    G, n_pad = _pick_group(n_pairs, k_in, k_out)
    M = n_pad // G
    Kin, Kout = G * k_in, G * k_out

    xf = x.reshape(n_pairs, k_in)             # free reshape for contiguous inputs
    if n_pad != n_pairs:                      # rare: no lane-dense divisor existed
        xf = jnp.pad(xf, ((0, n_pad - n_pairs), (0, 0)))
    xf = xf.reshape(M, Kin)

    a = jnp.asarray(_pooling_matrix_np(layer_type, W, G, jnp.dtype(x.dtype).name))

    # --- generation-aware tiling --------------------------------------------
    itemsize = jnp.dtype(x.dtype).itemsize
    sub = max(8, 32 // itemsize)              # sublane alignment: f32:8, bf16:16, i8:32
    gen = _tpu_generation()
    target_bytes = (4 << 20) if gen == 7 else (8 << 20)

    tm = max(1, target_bytes // (Kin * itemsize))
    if tm >= M:
        tm = M                                # block == full dim is always legal
    else:
        tm = max(sub, (tm // sub) * sub)
        tm = min(tm, M)
    # v7x has 2 TensorCores/chip: make sure the 'parallel' grid has >= 2 steps.
    if gen == 7 and tm == M and M > sub:
        tm = min(M, sub * _cdiv(_cdiv(M, 2), sub))
    grid = (_cdiv(M, tm),)

    # VMEM limit derived from the actual double-buffered footprint (+ headroom),
    # capped per generation (v7x only has 64 MiB physical VMEM).
    need = itemsize * (2 * tm * Kin + 2 * tm * Kout + 2 * Kin * Kout)
    cap = (48 << 20) if gen == 7 else (96 << 20)
    vmem_limit = int(min(cap, max(need + (4 << 20), 16 << 20)))

    cost = pl.CostEstimate(
        flops=2 * M * Kin * Kout,
        transcendentals=0,
        bytes_accessed=(M * Kin + M * Kout + Kin * Kout) * itemsize,
    )

    kernel = functools.partial(_pool_matmul_kernel, compute_dtype=compute_dtype)

    out = pl.pallas_call(
        kernel,
        out_shape=jax.ShapeDtypeStruct((M, Kout), x.dtype),
        grid=grid,
        in_specs=[
            pl.BlockSpec((tm, Kin), lambda i: (i, 0)),
            # A never changes across grid steps; it is only DMA'd once.  Kept on
            # the default buffering since its footprint is already counted above.
            pl.BlockSpec((Kin, Kout), lambda i: (0, 0)),
        ],
        out_specs=pl.BlockSpec((tm, Kout), lambda i: (i, 0)),
        compiler_params=pltpu.CompilerParams(
            dimension_semantics=("parallel",),
            vmem_limit_bytes=vmem_limit,
        ),
        cost_estimate=cost,
    )(xf, a)

    out = out.reshape(n_pad, Wo)
    if n_pad != n_pairs:
        out = out[:n_pairs]
    return out.reshape(N, C, Ho, Wo)


def _reference(x, layer_type):
    # Pure-JAX reference matching F.avg_pool2d(kernel=stride) semantics.
    if layer_type == 'none':
        return x
    N, C, H, W = x.shape
    if layer_type == 'timepreserve':
        H2 = H // 2
        return x[:, :, : 2 * H2, :].reshape(N, C, H2, 2, W).mean(axis=3)
    if layer_type == 'half':
        H2, W2 = H // 2, W // 2
        return x[:, :, : 2 * H2, : 2 * W2].reshape(N, C, H2, 2, W2, 2).mean(axis=(3, 5))
    raise RuntimeError(layer_type)


if __name__ == "__main__":
    key = jax.random.PRNGKey(0)
    k0, k1, k2 = jax.random.split(key, 3)

    def check(x, layer_type):
        out = jax.block_until_ready(downsample(x, layer_type))
        ref = _reference(x, layer_type)
        good = out.shape == ref.shape and bool(
            jnp.allclose(out, ref, atol=1e-5, rtol=1e-5))
        if not good:
            print(f"MISMATCH layer_type={layer_type} shape={tuple(x.shape)}")
        return good

    ok = True
    # DownSample has no parameters; only an NCHW activation tensor.
    x = jax.random.normal(k0, (2, 4, 16, 16), dtype=jnp.float32)
    for layer_type in ('none', 'timepreserve', 'half'):
        ok = check(x, layer_type) and ok

    # Prime number of row-pairs -> exercises the zero-padded lane-dense path.
    ok = check(jax.random.normal(k1, (1, 1, 14, 16), dtype=jnp.float32),
               'timepreserve') and ok
    # Odd H and W -> exercises the trim path and the non-128-multiple fallback.
    ok = check(jax.random.normal(k2, (2, 3, 15, 13), dtype=jnp.float32),
               'half') and ok

    if ok:
        print("KERNEL_OK")
</pallas_src>

<mosaic_0001>
module attributes {stable_mosaic.version = 11 : i64} {
  func.func @_pool_matmul_kernel(%arg0: i32, %arg1: memref<8x256xf32, #tpu.memory_space<vmem>>, %arg2: memref<256x128xf32, #tpu.memory_space<vmem>>, %arg3: memref<8x128xf32, #tpu.memory_space<vmem>>) attributes {dimension_semantics = [#tpu.dimension_semantics<parallel>], iteration_bounds = array<i64: 1>, scalar_prefetch = 0 : i64, scratch_operands = 0 : i64, tpu.core_type = #tpu.core_type<tc>, window_params = [{transform_indices = @transform_0, window_bounds = array<i64: 8, 256>}, {pipeline_mode = #tpu.pipeline_mode<synchronous>, transform_indices = @transform_1, window_bounds = array<i64: 256, 128>}, {transform_indices = @transform_2, window_bounds = array<i64: 8, 128>}]} {
    %c0 = arith.constant 0 : index
    %c0_0 = arith.constant 0 : index
    %0 = vector.load %arg1[%c0, %c0_0] : memref<8x256xf32, #tpu.memory_space<vmem>>, vector<8x256xf32>
    %c0_1 = arith.constant 0 : index
    %c0_2 = arith.constant 0 : index
    %1 = vector.load %arg2[%c0_1, %c0_2] : memref<256x128xf32, #tpu.memory_space<vmem>>, vector<256x128xf32>
    %cst = arith.constant dense<0.000000e+00> : vector<8x128xf32>
    %2 = tpu.matmul %0, %1, %cst {dimension_numbers = #tpu.dot_dimension_numbers<[1], [0], [0], [1], [0, 0, 1, 1], [], []>} : vector<8x256xf32>, vector<256x128xf32>, vector<8x128xf32> -> vector<8x128xf32>
    %c0_3 = arith.constant 0 : index
    %c0_4 = arith.constant 0 : index
    %3 = vector.load %arg3[%c0_3, %c0_4] : memref<8x128xf32, #tpu.memory_space<vmem>>, vector<8x128xf32>
    tpu.vector_store %arg3[%c0_3, %c0_4], %2 {strides = array<i32>} : memref<8x128xf32, #tpu.memory_space<vmem>>, vector<8x128xf32>,
    return
  }
  func.func @transform_0(%arg0: i32) -> (i32, i32) {
    %c0_i32 = arith.constant 0 : i32
    %c0_i32_0 = arith.constant 0 : i32
    return %arg0, %c0_i32 : i32, i32
  }
  func.func @transform_1(%arg0: i32) -> (i32, i32) {
    %c0_i32 = arith.constant 0 : i32
    %c0_i32_0 = arith.constant 0 : i32
    %c0_i32_1 = arith.constant 0 : i32
    return %c0_i32, %c0_i32_0 : i32, i32
  }
  func.func @transform_2(%arg0: i32) -> (i32, i32) {
    %c0_i32 = arith.constant 0 : i32
    %c0_i32_0 = arith.constant 0 : i32
    return %arg0, %c0_i32 : i32, i32
  }
}

</mosaic_0001>

<llo_original>
// kernel: tpu_custom_call.1
$region0: #{tpu_custom_call.1}
  #allocation0 [shape = 'u32[]', space=smem, size = 0x4, offset = 0x4, fixed_abs, tag = 'smem constant byte address 0x4 - core index']
  #allocation1 [shape = 'u32[72,128]{1,0:T(1,128)}', space=vmem, size = 0x9000, scoped, tag = 'internal scratch']
  %s0 = inlined_call_operand.hbm [shape: f32[8,256], index: 0, kind: input, shape index: {}]
  %s1 = inlined_call_operand.hbm [shape: f32[256,128], index: 1, kind: input, shape index: {}]
  %s2 = inlined_call_operand.hbm [shape: f32[8,128], index: 2, kind: output, shape index: {}]
  %s3 = sld [smem:[#allocation0]]
  $region26: #{tpu_custom_call.1} parent=0
    _
  %s5 = ssub.s32 1, %s3
  %s6 = scalar_select 0, %s5, %s3
  $region1: #{tpu_custom_call.1} parent=0
    #allocation2 [shape = 'u8[8192]{0}', space=vmem, size = 0x2000, scoped, tag = 'input window, operand 0, single buffered']
    #allocation3 [shape = 's32[1]{0}', space=sflag, size = 0x4, scoped, tag = 'scoped memory for tpu_custom_call.1']
    #allocation4 [shape = 's32[1]{0}', space=sflag, size = 0x4, scoped, tag = 'scoped memory for tpu_custom_call.1']
    #allocation5 [shape = 'u8[131072]{0}', space=vmem, size = 0x20000, scoped, tag = 'input window, operand 1, single buffered']
    #allocation6 [shape = 's32[1]{0}', space=sflag, size = 0x4, scoped, tag = 'scoped memory for tpu_custom_call.1']
    #allocation7 [shape = 'u8[4096]{0}', space=vmem, size = 0x1000, scoped, tag = 'output window, operand 0, single buffered']
    %7 = vsyncpa [#allocation3], 0
    %8 = vsyncpa [#allocation6], 0
    %9 = vsyncpa [#allocation4], 0
    // Predicated region
    $region2: #{tpu_custom_call.1} parent=1 // pred_check
      _
    $region3: #{tpu_custom_call.1} parent=1 // pred_check_branch
      %11 = sbr.rel (0) target = $region5
    $region4: #{tpu_custom_call.1} parent=1 // pred_region
      %13 = vsyncadd [#allocation3], 0
      %s15 = sshll.u32 %s0, 4
      %s16 = int_to_ptr.hbm [resolvable:$true] %s15
      %s17 = sshll.u32 [#allocation2], 4
      %s18 = int_to_ptr.vmem [resolvable:$true] %s17
      %20 = dma.hbm_to_vmem [thread:$0]  %s16, 256, %s18, [#allocation3]
    $region5: #{tpu_custom_call.1} parent=1 // pred_fallthru
      _
    // Predicated region
    $region6: #{tpu_custom_call.1} parent=1 // pred_check
      _
    $region7: #{tpu_custom_call.1} parent=1 // pred_check_branch
      %22 = sbr.rel (0) target = $region9
    $region8: #{tpu_custom_call.1} parent=1 // pred_region
      %24 = vsyncadd [#allocation6], 0
      %s25 = sshll.u32 %s1, 4
      %s26 = int_to_ptr.hbm [resolvable:$true] %s25
      %s27 = sshll.u32 [#allocation5], 4
      %s28 = int_to_ptr.vmem [resolvable:$true] %s27
      %33 = dma.hbm_to_vmem [thread:$0]  %s26, 4096, %s28, [#allocation6], 128, 128, 8
    $region9: #{tpu_custom_call.1} parent=1 // pred_fallthru
      _
    // Predicated region
    $region10: #{tpu_custom_call.1} parent=1 // pred_check
      _
    $region11: #{tpu_custom_call.1} parent=1 // pred_check_branch
      %35 = sbr.rel (0) target = $region13
    $region12: #{tpu_custom_call.1} parent=1 // pred_region
      %37 = dma.done [#allocation3], 256
    $region13: #{tpu_custom_call.1} parent=1 // pred_fallthru
      _
    // Predicated region
    $region14: #{tpu_custom_call.1} parent=1 // pred_check
      _
    $region15: #{tpu_custom_call.1} parent=1 // pred_check_branch
      %39 = sbr.rel (0) target = $region17
    $region16: #{tpu_custom_call.1} parent=1 // pred_region
      %41 = dma.done [#allocation6], 4096
    $region17: #{tpu_custom_call.1} parent=1 // pred_fallthru
      _
    %v42 = vld [vmem:[#allocation2] sm:$0xff]
    %v43 = vld [vmem:[#allocation2 + $0x8] sm:$0xff]
    %v44 = vld [vmem:[#allocation5] sm:$0xff]
    %v45 = vld [vmem:[#allocation5 + $0x8] sm:$0xff]
    %v46 = vld [vmem:[#allocation5 + $0x10] sm:$0xff]
    %v47 = vld [vmem:[#allocation5 + $0x18] sm:$0xff]
    %v48 = vld [vmem:[#allocation5 + $0x20] sm:$0xff]
    %v49 = vld [vmem:[#allocation5 + $0x28] sm:$0xff]
    %v50 = vld [vmem:[#allocation5 + $0x30] sm:$0xff]
    %v51 = vld [vmem:[#allocation5 + $0x38] sm:$0xff]
    %v52 = vld [vmem:[#allocation5 + $0x40] sm:$0xff]
    %v53 = vld [vmem:[#allocation5 + $0x48] sm:$0xff]
    %v54 = vld [vmem:[#allocation5 + $0x50] sm:$0xff]
    %v55 = vld [vmem:[#allocation5 + $0x58] sm:$0xff]
    %v56 = vld [vmem:[#allocation5 + $0x60] sm:$0xff]
    %v57 = vld [vmem:[#allocation5 + $0x68] sm:$0xff]
    %v58 = vld [vmem:[#allocation5 + $0x70] sm:$0xff]
    %v59 = vld [vmem:[#allocation5 + $0x78] sm:$0xff]
    %v60 = vld [vmem:[#allocation5 + $0x80] sm:$0xff]
    %v61 = vld [vmem:[#allocation5 + $0x88] sm:$0xff]
    %v62 = vld [vmem:[#allocation5 + $0x90] sm:$0xff]
    %v63 = vld [vmem:[#allocation5 + $0x98] sm:$0xff]
    %v64 = vld [vmem:[#allocation5 + $0xa0] sm:$0xff]
    %v65 = vld [vmem:[#allocation5 + $0xa8] sm:$0xff]
    %v66 = vld [vmem:[#allocation5 + $0xb0] sm:$0xff]
    %v67 = vld [vmem:[#allocation5 + $0xb8] sm:$0xff]
    %v68 = vld [vmem:[#allocation5 + $0xc0] sm:$0xff]
    %v69 = vld [vmem:[#allocation5 + $0xc8] sm:$0xff]
    %v70 = vld [vmem:[#allocation5 + $0xd0] sm:$0xff]
    %v71 = vld [vmem:[#allocation5 + $0xd8] sm:$0xff]
    %v72 = vld [vmem:[#allocation5 + $0xe0] sm:$0xff]
    %v73 = vld [vmem:[#allocation5 + $0xe8] sm:$0xff]
    %v74 = vld [vmem:[#allocation5 + $0xf0] sm:$0xff]
    %v75 = vld [vmem:[#allocation5 + $0xf8] sm:$0xff]
    %76 = vmatpush.msra.mxu0 %v59
    %77 = vmatpush.msra.mxu0 %v58
    %78 = vmatpush.msra.mxu0 %v57
    %79 = vmatpush.msra.mxu0 %v56
    %80 = vmatpush.msra.mxu0 %v55
    %81 = vmatpush.msra.mxu0 %v54
    %82 = vmatpush.msra.mxu0 %v53
    %83 = vmatpush.msra.mxu0 %v52
    %84 = vmatpush.msra.mxu0 %v51
    %85 = vmatpush.msra.mxu0 %v50
    %86 = vmatpush.msra.mxu0 %v49
    %87 = vmatpush.msra.mxu0 %v48
    %88 = vmatpush.msra.mxu0 %v47
    %89 = vmatpush.msra.mxu0 %v46
    %90 = vmatpush.msra.mxu0 %v45
    %91 = vmatpush.msra.mxu0 %v44
    %92 = vmatmul.f32.gmra.mxu0 %v42
    %v93 = vpop.f32.mrf.mxu0
    %v94 = vadd.f32 0.0, %v93
    %95 = vdwg.mxu0
    %96 = vmatpush.msra.mxu0 %v75
    %97 = vmatpush.msra.mxu0 %v74
    %98 = vmatpush.msra.mxu0 %v73
    %99 = vmatpush.msra.mxu0 %v72
    %100 = vmatpush.msra.mxu0 %v71
    %101 = vmatpush.msra.mxu0 %v70
    %102 = vmatpush.msra.mxu0 %v69
    %103 = vmatpush.msra.mxu0 %v68
    %104 = vmatpush.msra.mxu0 %v67
    %105 = vmatpush.msra.mxu0 %v66
    %106 = vmatpush.msra.mxu0 %v65
    %107 = vmatpush.msra.mxu0 %v64
    %108 = vmatpush.msra.mxu0 %v63
    %109 = vmatpush.msra.mxu0 %v62
    %110 = vmatpush.msra.mxu0 %v61
    %111 = vmatpush.msra.mxu0 %v60
    %112 = vmatmul.f32.gmra.mxu0 %v43
    %v113 = vpop.f32.mrf.mxu0
    %v114 = vadd.f32 %v94, %v113
    %115 = vdwg.mxu0
    %116 = vst [vmem:[#allocation7] sm:$0xff] %v114
    // Predicated region
    $region18: #{tpu_custom_call.1} parent=1 // pred_check
      _
    $region19: #{tpu_custom_call.1} parent=1 // pred_check_branch
      %118 = sbr.rel (0) target = $region21
    $region20: #{tpu_custom_call.1} parent=1 // pred_region
      %120 = vsyncadd [#allocation4], 0
      %s122 = sshll.u32 [#allocation7], 4
      %s123 = int_to_ptr.vmem [resolvable:$true] %s122
      %s124 = sshll.u32 %s2, 4
      %s125 = int_to_ptr.hbm [resolvable:$true] %s124
      %127 = dma.vmem_to_hbm [thread:$0]  %s123, 128, %s125, [#allocation4]
    $region21: #{tpu_custom_call.1} parent=1 // pred_fallthru
      _
    // Predicated region
    $region22: #{tpu_custom_call.1} parent=1 // pred_check
      _
    $region23: #{tpu_custom_call.1} parent=1 // pred_check_branch
      %129 = sbr.rel (0) target = $region25
    $region24: #{tpu_custom_call.1} parent=1 // pred_region
      %131 = dma.done [#allocation4], 128
    $region25: #{tpu_custom_call.1} parent=1 // pred_fallthru
      _
    %132 = vsyncpa [#allocation3], 1
    %133 = vsyncpa [#allocation6], 1
    %134 = vsyncpa [#allocation4], 1

</llo_original>
